<compile_context>
chip_gen: v6e
topology: v6e:2x2x1
jax: 0.10.0
libtpu: 0.0.40
codegen_flags: <defaults>
</compile_context>

<pallas_src>
import functools

import numpy as np
import jax
import jax.numpy as jnp
from jax.experimental import pallas as pl
from jax.experimental.pallas import tpu as pltpu

_MIB = 1024 * 1024


def _tv_kernel(mask_h_ref, mask_w_ref, x_ref, h_ref, w_ref, *,
               n_rows, rows_per_block, shift_h, shift_w, has_tail):
    """Partial TV sums for one block of whole (H, W) planes.

    The x block is (rows_per_block, H*W): one plane per sublane row, spatial
    dims flattened onto the lane axis.
    """
    x = x_ref[...].astype(jnp.float32)                    # (rows, HW)

    if has_tail:
        # Statically known non-dividing case only: zero padded tail rows with
        # a tiny (rows, 1) iota + select on x *before* the rolls.  This must
        # stay a select (not a multiply): padded rows hold arbitrary garbage
        # and NaN * 0 would poison the partial sums.
        g = pl.program_id(0)
        row_ids = jax.lax.broadcasted_iota(jnp.int32, (rows_per_block, 1), 0)
        x = jnp.where(row_ids < (n_rows - g * rows_per_block), x, 0.0)

    # Neighbours along the flattened H*W lane axis via XLU rotations
    # (shift_h = HW - W -> x[i + W], next row; shift_w = HW - 1 -> x[i + 1],
    # next column).  Wrap-around lanes are finite and killed by the masks.
    x_down = pltpu.roll(x, shift_h, axis=1)
    x_right = pltpu.roll(x, shift_w, axis=1)

    # Pair-validity masks applied as f32 multiplies on the differences
    # (cheaper than compare/and/select; safe because x is already finite).
    dh = (x_down - x) * mask_h_ref[...]
    dw = (x_right - x) * mask_w_ref[...]

    h_ref[...] = jnp.sum(dh * dh).reshape(1, 1, 1)
    w_ref[...] = jnp.sum(dw * dw).reshape(1, 1, 1)


def _vmem_capacity_bytes():
    try:
        return int(pltpu.get_tpu_info().vmem_capacity_bytes)
    except Exception:
        return 128 * _MIB


def tv_loss(x, tvloss_weight=1.0):
    """Pallas TPU implementation of TVLoss.forward for NCHW input x."""
    B, C, H, W = x.shape
    count_h = C * (H - 1) * W
    count_w = C * H * (W - 1)

    P = B * C
    HW = H * W
    xf = x.reshape(P, HW)          # free, contiguous reshape; lane-dense last dim

    itemsize = int(x.dtype.itemsize)
    plane_bytes = HW * itemsize
    total_bytes = P * plane_bytes

    # Generation-aware budgets: v7x has 64 MiB VMEM per TensorCore, v5e/v6e
    # have 128 MiB.  Bigger blocks amortize the ~0.35 us/step overhead.
    vmem_cap = _vmem_capacity_bytes()
    small_vmem = vmem_cap <= 96 * _MIB                   # v7x-class
    target_block_bytes = 4 * _MIB if small_vmem else 8 * _MIB
    base_limit = 48 * _MIB if small_vmem else 64 * _MIB

    # Whole planes per grid step.  rows must be a multiple of 8 (sublane
    # divisibility rule) or equal to P (full dim).
    rows_target = max(1, target_block_bytes // max(plane_bytes, 1))
    if P <= max(8, rows_target):
        rows = P
    else:
        rows = max(8, (min(rows_target, P) // 8) * 8)

    # v7x has 2 TensorCores; dimension_semantics=("parallel",) shards the grid
    # across them, so medium-sized inputs should produce at least 2 steps.
    if total_bytes >= 4 * _MIB and P >= 16 and pl.cdiv(P, rows) < 2:
        rows = max(8, ((P // 2) // 8) * 8)

    grid = pl.cdiv(P, rows)
    has_tail = (P % rows) != 0

    # VMEM limit: base budget, bumped if a forced-8-row block (huge planes)
    # needs more, and always capped below physical VMEM.
    block_in_bytes = rows * HW * itemsize
    block_f32_bytes = rows * HW * 4
    vmem_needed = 2 * block_in_bytes + 3 * block_f32_bytes + 2 * HW * 4 + 2 * _MIB
    vmem_limit = int(min(max(base_limit, vmem_needed),
                         max(vmem_cap - 8 * _MIB, 16 * _MIB)))

    # Pair-validity masks along the flattened H*W axis (host-built constants;
    # their block index is constant so they're DMA'd into VMEM only once):
    #   vertical pair (i, i+W) exists   <=>  i <  (H-1)*W
    #   horizontal pair (i, i+1) exists <=>  i % W != W-1
    idx = np.arange(HW)
    mask_h = jnp.asarray((idx < (H - 1) * W).astype(np.float32)).reshape(1, HW)
    mask_w = jnp.asarray(((idx % W) != (W - 1)).astype(np.float32)).reshape(1, HW)

    kernel = functools.partial(
        _tv_kernel,
        n_rows=P,
        rows_per_block=rows,
        shift_h=HW - W,
        shift_w=HW - 1,
        has_tail=has_tail,
    )

    cost = pl.CostEstimate(
        flops=8 * x.size,
        transcendentals=0,
        bytes_accessed=int(x.size * itemsize + 2 * HW * 4 + 2 * grid * 4),
    )

    h_parts, w_parts = pl.pallas_call(
        kernel,
        out_shape=(jax.ShapeDtypeStruct((grid, 1, 1), jnp.float32),
                   jax.ShapeDtypeStruct((grid, 1, 1), jnp.float32)),
        grid_spec=pltpu.PrefetchScalarGridSpec(
            num_scalar_prefetch=0,
            grid=(grid,),
            in_specs=[
                pl.BlockSpec((1, HW), lambda g: (0, 0)),     # vertical-pair mask
                pl.BlockSpec((1, HW), lambda g: (0, 0)),     # horizontal-pair mask
                pl.BlockSpec((rows, HW), lambda g: (g, 0)),  # plane chunk
            ],
            out_specs=[
                pl.BlockSpec((1, 1, 1), lambda g: (g, 0, 0)),  # per-step h partial
                pl.BlockSpec((1, 1, 1), lambda g: (g, 0, 0)),  # per-step w partial
            ],
        ),
        compiler_params=pltpu.CompilerParams(
            dimension_semantics=("parallel",),   # no shared scratch: safe
            vmem_limit_bytes=vmem_limit,
        ),
        cost_estimate=cost,
    )(mask_h, mask_w, xf)

    h_tv = jnp.sum(h_parts)
    w_tv = jnp.sum(w_parts)
    return (tvloss_weight * 2.0 * (h_tv / count_h + w_tv / count_w)
            / B).astype(jnp.float32)


def tv_loss_ref(x, tvloss_weight=1.0):
    """Pure-JAX reference matching the PyTorch module exactly."""
    B, C, H, W = x.shape
    count_h = C * (H - 1) * W
    count_w = C * H * (W - 1)
    h_tv = jnp.sum((x[:, :, 1:, :] - x[:, :, :H - 1, :]) ** 2)
    w_tv = jnp.sum((x[:, :, :, 1:] - x[:, :, :, :W - 1]) ** 2)
    return tvloss_weight * 2.0 * (h_tv / count_h + w_tv / count_w) / B


if __name__ == "__main__":
    key = jax.random.PRNGKey(0)
    B, C, H, W = 2, 4, 16, 16
    x = jax.random.normal(key, (B, C, H, W), dtype=jnp.float32)

    out = tv_loss(x, tvloss_weight=1.0)
    out = jax.block_until_ready(out)

    ref = tv_loss_ref(x, tvloss_weight=1.0)
    assert jnp.allclose(out, ref, rtol=1e-5, atol=1e-5), (out, ref)
    print("KERNEL_OK")
</pallas_src>

<mosaic_0001>
module attributes {stable_mosaic.version = 11 : i64} {
  func.func @_tv_kernel(%arg0: i32, %arg1: memref<1x256xf32, #tpu.memory_space<vmem>>, %arg2: memref<1x256xf32, #tpu.memory_space<vmem>>, %arg3: memref<8x256xf32, #tpu.memory_space<vmem>>, %arg4: memref<1x1x1xf32, #tpu.memory_space<vmem>>, %arg5: memref<1x1x1xf32, #tpu.memory_space<vmem>>) attributes {dimension_semantics = [#tpu.dimension_semantics<parallel>], iteration_bounds = array<i64: 1>, scalar_prefetch = 0 : i64, scratch_operands = 0 : i64, tpu.core_type = #tpu.core_type<tc>, window_params = [{pipeline_mode = #tpu.pipeline_mode<synchronous>, transform_indices = @transform_0, window_bounds = array<i64: 1, 256>}, {pipeline_mode = #tpu.pipeline_mode<synchronous>, transform_indices = @transform_1, window_bounds = array<i64: 1, 256>}, {transform_indices = @transform_2, window_bounds = array<i64: 8, 256>}, {transform_indices = @transform_3, window_bounds = array<i64: 1, 1, 1>}, {transform_indices = @transform_4, window_bounds = array<i64: 1, 1, 1>}]} {
    %c0 = arith.constant 0 : index
    %c0_0 = arith.constant 0 : index
    %0 = vector.load %arg3[%c0, %c0_0] : memref<8x256xf32, #tpu.memory_space<vmem>>, vector<8x256xf32>
    %c240_i32 = arith.constant 240 : i32
    %1 = tpu.dynamic_rotate %0 by %c240_i32 dim 1 : vector<8x256xf32>, i32 -> vector<8x256xf32>
    %c255_i32 = arith.constant 255 : i32
    %2 = tpu.dynamic_rotate %0 by %c255_i32 dim 1 : vector<8x256xf32>, i32 -> vector<8x256xf32>
    %3 = arith.subf %1, %0 : vector<8x256xf32>
    %c0_1 = arith.constant 0 : index
    %c0_2 = arith.constant 0 : index
    %4 = vector.load %arg1[%c0_1, %c0_2] : memref<1x256xf32, #tpu.memory_space<vmem>>, vector<1x256xf32>
    %5 = vector.broadcast %4 : vector<1x256xf32> to vector<8x256xf32>
    %6 = arith.mulf %3, %5 : vector<8x256xf32>
    %7 = arith.subf %2, %0 : vector<8x256xf32>
    %c0_3 = arith.constant 0 : index
    %c0_4 = arith.constant 0 : index
    %8 = vector.load %arg2[%c0_3, %c0_4] : memref<1x256xf32, #tpu.memory_space<vmem>>, vector<1x256xf32>
    %9 = vector.broadcast %8 : vector<1x256xf32> to vector<8x256xf32>
    %10 = arith.mulf %7, %9 : vector<8x256xf32>
    %11 = arith.mulf %6, %6 : vector<8x256xf32>
    %12 = vector.shape_cast %11 : vector<8x256xf32> to vector<1x8x256xf32>
    %cst = arith.constant dense<0.000000e+00> : vector<1xf32>
    %13 = vector.multi_reduction <add>, %12, %cst [1, 2] : vector<1x8x256xf32> to vector<1xf32>
    %14 = vector.shape_cast %13 : vector<1xf32> to vector<1x1x1xf32>
    %15 = vector.extract %14[0, 0, 0] : f32 from vector<1x1x1xf32>
    %16 = vector.broadcast %15 : f32 to vector<1x1x1xf32>
    %c0_5 = arith.constant 0 : index
    %c0_6 = arith.constant 0 : index
    %c0_7 = arith.constant 0 : index
    %17 = vector.load %arg4[%c0_5, %c0_6, %c0_7] : memref<1x1x1xf32, #tpu.memory_space<vmem>>, vector<1x1x1xf32>
    tpu.vector_store %arg4[%c0_5, %c0_6, %c0_7], %16 {strides = array<i32>} : memref<1x1x1xf32, #tpu.memory_space<vmem>>, vector<1x1x1xf32>,
    %18 = arith.mulf %10, %10 : vector<8x256xf32>
    %19 = vector.shape_cast %18 : vector<8x256xf32> to vector<1x8x256xf32>
    %cst_8 = arith.constant dense<0.000000e+00> : vector<1xf32>
    %20 = vector.multi_reduction <add>, %19, %cst_8 [1, 2] : vector<1x8x256xf32> to vector<1xf32>
    %21 = vector.shape_cast %20 : vector<1xf32> to vector<1x1x1xf32>
    %22 = vector.extract %21[0, 0, 0] : f32 from vector<1x1x1xf32>
    %23 = vector.broadcast %22 : f32 to vector<1x1x1xf32>
    %c0_9 = arith.constant 0 : index
    %c0_10 = arith.constant 0 : index
    %c0_11 = arith.constant 0 : index
    %24 = vector.load %arg5[%c0_9, %c0_10, %c0_11] : memref<1x1x1xf32, #tpu.memory_space<vmem>>, vector<1x1x1xf32>
    tpu.vector_store %arg5[%c0_9, %c0_10, %c0_11], %23 {strides = array<i32>} : memref<1x1x1xf32, #tpu.memory_space<vmem>>, vector<1x1x1xf32>,
    return
  }
  func.func @transform_0(%arg0: i32) -> (i32, i32) {
    %c0_i32 = arith.constant 0 : i32
    %c0_i32_0 = arith.constant 0 : i32
    %c0_i32_1 = arith.constant 0 : i32
    return %c0_i32, %c0_i32_0 : i32, i32
  }
  func.func @transform_1(%arg0: i32) -> (i32, i32) {
    %c0_i32 = arith.constant 0 : i32
    %c0_i32_0 = arith.constant 0 : i32
    %c0_i32_1 = arith.constant 0 : i32
    return %c0_i32, %c0_i32_0 : i32, i32
  }
  func.func @transform_2(%arg0: i32) -> (i32, i32) {
    %c0_i32 = arith.constant 0 : i32
    %c0_i32_0 = arith.constant 0 : i32
    return %arg0, %c0_i32 : i32, i32
  }
  func.func @transform_3(%arg0: i32) -> (i32, i32, i32) {
    %c0_i32 = arith.constant 0 : i32
    %c0_i32_0 = arith.constant 0 : i32
    %c0_i32_1 = arith.constant 0 : i32
    return %arg0, %c0_i32, %c0_i32_0 : i32, i32, i32
  }
  func.func @transform_4(%arg0: i32) -> (i32, i32, i32) {
    %c0_i32 = arith.constant 0 : i32
    %c0_i32_0 = arith.constant 0 : i32
    %c0_i32_1 = arith.constant 0 : i32
    return %arg0, %c0_i32, %c0_i32_0 : i32, i32, i32
  }
}

</mosaic_0001>

<llo_original>
// kernel: tpu_custom_call.1
$region0: #{tpu_custom_call.1}
  #allocation0 [shape = 'u32[]', space=smem, size = 0x4, offset = 0x4, fixed_abs, tag = 'smem constant byte address 0x4 - core index']
  #allocation1 [shape = 'u32[144,128]{1,0:T(1,128)}', space=vmem, size = 0x12000, scoped, tag = 'internal scratch']
  %s0 = inlined_call_operand.hbm [shape: f32[1,256], index: 0, kind: input, shape index: {}]
  %s1 = inlined_call_operand.hbm [shape: f32[1,256], index: 1, kind: input, shape index: {}]
  %s2 = inlined_call_operand.hbm [shape: f32[8,256], index: 2, kind: input, shape index: {}]
  %s3 = inlined_call_operand.hbm [shape: f32[1,1,1], index: 3, kind: output, shape index: {0}]
  %s4 = inlined_call_operand.hbm [shape: f32[1,1,1], index: 4, kind: output, shape index: {1}]
  %5 = xla_tuple %s3, %s4
  %s6 = sld [smem:[#allocation0]]
  $region42: #{tpu_custom_call.1} parent=0
    _
  %s8 = ssub.s32 1, %s6
  %s9 = scalar_select 0, %s8, %s6
  $region1: #{tpu_custom_call.1} parent=0
    #allocation2 [shape = 'u8[1024]{0}', space=vmem, size = 0x400, scoped, tag = 'input window, operand 0, single buffered']
    #allocation3 [shape = 's32[1]{0}', space=sflag, size = 0x4, scoped, tag = 'scoped memory for tpu_custom_call.1']
    #allocation4 [shape = 's32[1]{0}', space=sflag, size = 0x4, scoped, tag = 'scoped memory for tpu_custom_call.1']
    #allocation5 [shape = 'u8[1024]{0}', space=vmem, size = 0x400, scoped, tag = 'input window, operand 1, single buffered']
    #allocation6 [shape = 's32[1]{0}', space=sflag, size = 0x4, scoped, tag = 'scoped memory for tpu_custom_call.1']
    #allocation7 [shape = 'u8[8192]{0}', space=vmem, size = 0x2000, scoped, tag = 'input window, operand 2, single buffered']
    #allocation8 [shape = 'u8[512]{0}', space=vmem, size = 0x400, scoped, tag = 'output window, operand 0, single buffered']
    #allocation9 [shape = 'u8[512]{0}', space=vmem, size = 0x400, scoped, tag = 'output window, operand 1, single buffered']
    #allocation10 [shape = 's32[1]{0}', space=sflag, size = 0x4, scoped, tag = 'scoped memory for tpu_custom_call.1']
    %10 = vsyncpa [#allocation3], 0
    %11 = vsyncpa [#allocation6], 0
    %12 = vsyncpa [#allocation4], 0
    %13 = vsyncpa [#allocation10], 0
    // Predicated region
    $region2: #{tpu_custom_call.1} parent=1 // pred_check
      _
    $region3: #{tpu_custom_call.1} parent=1 // pred_check_branch
      %15 = sbr.rel (0) target = $region5
    $region4: #{tpu_custom_call.1} parent=1 // pred_region
      %s17 = ssub.s32 32, 32
      %18 = vsyncadd [#allocation3], %s17
      %s20 = sshll.u32 [#allocation2], 4
      %s21 = int_to_ptr.vmem [resolvable:$true] %s20
      %23 = dma.hbm_to_vmem [thread:$0]  %s0, 32, %s21, [#allocation3]
    $region5: #{tpu_custom_call.1} parent=1 // pred_fallthru
      _
    // Predicated region
    $region6: #{tpu_custom_call.1} parent=1 // pred_check
      _
    $region7: #{tpu_custom_call.1} parent=1 // pred_check_branch
      %25 = sbr.rel (0) target = $region9
    $region8: #{tpu_custom_call.1} parent=1 // pred_region
      %s27 = ssub.s32 32, 32
      %28 = vsyncadd [#allocation6], %s27
      %s30 = sshll.u32 [#allocation5], 4
      %s31 = int_to_ptr.vmem [resolvable:$true] %s30
      %33 = dma.hbm_to_vmem [thread:$0]  %s1, 32, %s31, [#allocation6]
    $region9: #{tpu_custom_call.1} parent=1 // pred_fallthru
      _
    // Predicated region
    $region10: #{tpu_custom_call.1} parent=1 // pred_check
      _
    $region11: #{tpu_custom_call.1} parent=1 // pred_check_branch
      %35 = sbr.rel (0) target = $region13
    $region12: #{tpu_custom_call.1} parent=1 // pred_region
      %s37 = ssub.s32 256, 256
      %38 = vsyncadd [#allocation6], %s37
      %s40 = sshll.u32 [#allocation7], 4
      %s41 = int_to_ptr.vmem [resolvable:$true] %s40
      %43 = dma.hbm_to_vmem [thread:$0]  %s2, 256, %s41, [#allocation6]
    $region13: #{tpu_custom_call.1} parent=1 // pred_fallthru
      _
    // Predicated region
    $region14: #{tpu_custom_call.1} parent=1 // pred_check
      _
    $region15: #{tpu_custom_call.1} parent=1 // pred_check_branch
      %45 = sbr.rel (0) target = $region17
    $region16: #{tpu_custom_call.1} parent=1 // pred_region
      %46 = dma.done [#allocation3], 32
    $region17: #{tpu_custom_call.1} parent=1 // pred_fallthru
      _
    // Predicated region
    $region18: #{tpu_custom_call.1} parent=1 // pred_check
      _
    $region19: #{tpu_custom_call.1} parent=1 // pred_check_branch
      %48 = sbr.rel (0) target = $region21
    $region20: #{tpu_custom_call.1} parent=1 // pred_region
      %49 = dma.done [#allocation6], 32
    $region21: #{tpu_custom_call.1} parent=1 // pred_fallthru
      _
    // Predicated region
    $region22: #{tpu_custom_call.1} parent=1 // pred_check
      _
    $region23: #{tpu_custom_call.1} parent=1 // pred_check_branch
      %51 = sbr.rel (0) target = $region25
    $region24: #{tpu_custom_call.1} parent=1 // pred_region
      %52 = dma.done [#allocation6], 256
    $region25: #{tpu_custom_call.1} parent=1 // pred_fallthru
      _
    %v53 = vld [vmem:[#allocation7] sm:$0xff]
    %v54 = vld [vmem:[#allocation7 + $0x8] sm:$0xff]
    %55 = vrot.lane.b32.xlu0 %v53, 112
    %v56 = vpop.permute.xlu0 %55
    %57 = vrot.lane.b32.xlu0 %v54, 112
    %v58 = vpop.permute.xlu0 %57
    %v59 = vlaneseq
    %v60 = vand.u32 %v59, 127
    %vm61 = vcmp.lt.s32.totalorder %v60, 112
    %v62 = vsel %vm61, %v56, %v58
    %v63 = vsel %vm61, %v58, %v56
    %64 = vrot.lane.b32.xlu0 %v53, 127
    %v65 = vpop.permute.xlu0 %64
    %66 = vrot.lane.b32.xlu0 %v54, 127
    %v67 = vpop.permute.xlu0 %66
    %vm68 = vcmp.lt.s32.totalorder %v60, 127
    %v69 = vsel %vm68, %v65, %v67
    %v70 = vsel %vm68, %v67, %v65
    %v71 = vsub.f32 %v62, %v53
    %v72 = vsub.f32 %v63, %v54
    %v73 = vld [vmem:[#allocation2] sm:$0x3]
    %v75 = vlaneseq
    %v76 = vshrl.u32 %v75, 7
    %v77 = vsub.s32 0, %v76
    %v78 = vrot.slane %v73, %v77
    %v79 = vlaneseq
    %v80 = vshrl.u32 %v79, 7
    %v81 = vsub.s32 1, %v80
    %v82 = vrot.slane %v73, %v81
    %v85 = vmul.f32 %v71, %v78
    %v86 = vmul.f32 %v72, %v82
    %v87 = vsub.f32 %v69, %v53
    %v88 = vsub.f32 %v70, %v54
    %v89 = vld [vmem:[#allocation5] sm:$0x3]
    %v91 = vlaneseq
    %v92 = vshrl.u32 %v91, 7
    %v93 = vsub.s32 0, %v92
    %v94 = vrot.slane %v89, %v93
    %v95 = vlaneseq
    %v96 = vshrl.u32 %v95, 7
    %v97 = vsub.s32 1, %v96
    %v98 = vrot.slane %v89, %v97
    %v101 = vmul.f32 %v87, %v94
    %v102 = vmul.f32 %v88, %v98
    %v103 = vmul.f32 %v85, %v85
    %v104 = vmul.f32 %v86, %v86
    %v105 = vadd.f32 %v103, %v104
    %106 = vadd.xlane.f32.xlu0 %v105
    %v107 = vpop.xlane.xlu0 %106
    %v108 = vrot.slane %v107, 4
    %v109 = vadd.f32 %v107, %v108
    %v110 = vrot.slane %v109, 2
    %v111 = vadd.f32 %v109, %v110
    %v112 = vrot.slane %v111, 1
    %v113 = vadd.f32 %v111, %v112
    %s114 = vtos %v113
    %v115 = vstv %s114
    %vm116 = vcmask 0
    %117 = vst.msk [vmem:[#allocation8] sm:$0x1] %vm116, %v115
    %v118 = vmul.f32 %v101, %v101
    %v119 = vmul.f32 %v102, %v102
    %v120 = vadd.f32 %v118, %v119
    %121 = vadd.xlane.f32.xlu0 %v120
    %v122 = vpop.xlane.xlu0 %121
    %v123 = vrot.slane %v122, 4
    %v124 = vadd.f32 %v122, %v123
    %v125 = vrot.slane %v124, 2
    %v126 = vadd.f32 %v124, %v125
    %v127 = vrot.slane %v126, 1
    %v128 = vadd.f32 %v126, %v127
    %s129 = vtos %v128
    %v130 = vstv %s129
    %131 = vst.msk [vmem:[#allocation9] sm:$0x1] %vm116, %v130
    // Predicated region
    $region26: #{tpu_custom_call.1} parent=1 // pred_check
      _
    $region27: #{tpu_custom_call.1} parent=1 // pred_check_branch
      %133 = sbr.rel (0) target = $region29
    $region28: #{tpu_custom_call.1} parent=1 // pred_region
      %s135 = ssub.s32 16, 16
      %136 = vsyncadd [#allocation4], %s135
      %s138 = sshll.u32 [#allocation8], 4
      %s139 = int_to_ptr.vmem [resolvable:$true] %s138
      %141 = dma.vmem_to_hbm [thread:$0]  %s139, 16, %s3, [#allocation4]
    $region29: #{tpu_custom_call.1} parent=1 // pred_fallthru
      _
    // Predicated region
    $region30: #{tpu_custom_call.1} parent=1 // pred_check
      _
    $region31: #{tpu_custom_call.1} parent=1 // pred_check_branch
      %143 = sbr.rel (0) target = $region33
    $region32: #{tpu_custom_call.1} parent=1 // pred_region
      %s145 = ssub.s32 16, 16
      %146 = vsyncadd [#allocation10], %s145
      %s148 = sshll.u32 [#allocation9], 4
      %s149 = int_to_ptr.vmem [resolvable:$true] %s148
      %151 = dma.vmem_to_hbm [thread:$0]  %s149, 16, %s4, [#allocation10]
    $region33: #{tpu_custom_call.1} parent=1 // pred_fallthru
      _
    // Predicated region
    $region34: #{tpu_custom_call.1} parent=1 // pred_check
      _
    $region35: #{tpu_custom_call.1} parent=1 // pred_check_branch
      %153 = sbr.rel (0) target = $region37
    $region36: #{tpu_custom_call.1} parent=1 // pred_region
      %154 = dma.done [#allocation4], 16
    $region37: #{tpu_custom_call.1} parent=1 // pred_fallthru
      _
    // Predicated region
    $region38: #{tpu_custom_call.1} parent=1 // pred_check
      _
    $region39: #{tpu_custom_call.1} parent=1 // pred_check_branch
      %156 = sbr.rel (0) target = $region41
    $region40: #{tpu_custom_call.1} parent=1 // pred_region
      %157 = dma.done [#allocation10], 16
    $region41: #{tpu_custom_call.1} parent=1 // pred_fallthru
      _
    %158 = vsyncpa [#allocation3], 1
    %159 = vsyncpa [#allocation6], 1
    %160 = vsyncpa [#allocation4], 1
    %161 = vsyncpa [#allocation10], 1

</llo_original>
